<compile_context>
chip_gen: v7x
topology: tpu7x:2x2x1
jax: 0.10.0
libtpu: 0.0.40
codegen_flags: <defaults>
</compile_context>

<pallas_src>
import jax
import jax.numpy as jnp
from jax.experimental import pallas as pl
from jax.experimental.pallas import tpu as pltpu


def mean_params_kernel(mean_ref, scale_ref, out_mean_ref, out_scale_ref):
    # Pure pass-through: the forward just returns the stored parameters.
    out_mean_ref[...] = mean_ref[...]
    out_scale_ref[...] = scale_ref[...]


def _pick_block_n(N: int) -> int:
    """Lane-dense block along N: multiple of 128 dividing N, capped at 512."""
    if N % 128 != 0:
        return N  # full extent (allowed even if not (8,128)-divisible)
    bn = min(N, 512)
    while N % bn != 0:
        bn //= 2
    return bn


def mean_params(x, mean, scale):
    """Forward of MeanParams.

    x:     any array — ignored by the module's forward (never DMA'd).
    mean:  (batch_size, N) parameter.
    scale: (N,) parameter.
    Returns [mean, scale] (copies produced by the Pallas kernel).
    """
    del x  # forward ignores its input
    B, N = mean.shape
    scale2 = scale.reshape(1, N)  # 2-D so the lane axis is the last dim

    bn = _pick_block_n(N)
    grid = (N // bn,)

    bytes_accessed = 2 * (B * N + N) * mean.dtype.itemsize  # read + write

    out_mean, out_scale2 = pl.pallas_call(
        mean_params_kernel,
        out_shape=(
            jax.ShapeDtypeStruct((B, N), mean.dtype),
            jax.ShapeDtypeStruct((1, N), scale.dtype),
        ),
        grid=grid,
        in_specs=[
            pl.BlockSpec((B, bn), lambda j: (0, j)),
            pl.BlockSpec((1, bn), lambda j: (0, j)),
        ],
        out_specs=(
            pl.BlockSpec((B, bn), lambda j: (0, j)),
            pl.BlockSpec((1, bn), lambda j: (0, j)),
        ),
        compiler_params=pltpu.CompilerParams(
            dimension_semantics=("parallel",),
        ),
        cost_estimate=pl.CostEstimate(
            flops=0, transcendentals=0, bytes_accessed=bytes_accessed
        ),
    )(mean, scale2)

    return [out_mean, out_scale2.reshape(N)]


def mean_params_ref(mean, scale):
    return [mean, scale]


if __name__ == "__main__":
    # Module hyper-parameters (small, TPU-friendly shapes).
    N, batch_size = 256, 8
    mean_val, scale_val = 0.5, 1.3

    key = jax.random.PRNGKey(0)
    # x is required by the forward signature but is ignored by the module.
    x = jax.random.normal(key, (batch_size, N), dtype=jnp.float32)

    # Stored parameters exactly as MeanParams.__init__ builds them.
    mean = jnp.full((batch_size, N), mean_val, dtype=jnp.float32)
    scale = jnp.full((N,), scale_val, dtype=jnp.float32)

    out_mean, out_scale = mean_params(x, mean, scale)
    jax.block_until_ready(out_mean)
    jax.block_until_ready(out_scale)

    ref_mean, ref_scale = mean_params_ref(mean, scale)
    assert out_mean.shape == (batch_size, N)
    assert out_scale.shape == (N,)
    assert jnp.allclose(out_mean, ref_mean)
    assert jnp.allclose(out_scale, ref_scale)

    print("KERNEL_OK")
</pallas_src>

<mosaic_0001>
module attributes {stable_mosaic.version = 11 : i64} {
  func.func @mean_params_kernel(%arg0: i32, %arg1: memref<8x256xf32, #tpu.memory_space<vmem>>, %arg2: memref<1x256xf32, #tpu.memory_space<vmem>>, %arg3: memref<8x256xf32, #tpu.memory_space<vmem>>, %arg4: memref<1x256xf32, #tpu.memory_space<vmem>>) attributes {dimension_semantics = [#tpu.dimension_semantics<parallel>], iteration_bounds = array<i64: 1>, scalar_prefetch = 0 : i64, scratch_operands = 0 : i64, tpu.core_type = #tpu.core_type<tc>, window_params = [{transform_indices = @transform_0, window_bounds = array<i64: 8, 256>}, {transform_indices = @transform_1, window_bounds = array<i64: 1, 256>}, {transform_indices = @transform_2, window_bounds = array<i64: 8, 256>}, {transform_indices = @transform_3, window_bounds = array<i64: 1, 256>}]} {
    %c0 = arith.constant 0 : index
    %c0_0 = arith.constant 0 : index
    %0 = vector.load %arg1[%c0, %c0_0] : memref<8x256xf32, #tpu.memory_space<vmem>>, vector<8x256xf32>
    %c0_1 = arith.constant 0 : index
    %c0_2 = arith.constant 0 : index
    %1 = vector.load %arg3[%c0_1, %c0_2] : memref<8x256xf32, #tpu.memory_space<vmem>>, vector<8x256xf32>
    tpu.vector_store %arg3[%c0_1, %c0_2], %0 {strides = array<i32>} : memref<8x256xf32, #tpu.memory_space<vmem>>, vector<8x256xf32>,
    %c0_3 = arith.constant 0 : index
    %c0_4 = arith.constant 0 : index
    %2 = vector.load %arg2[%c0_3, %c0_4] : memref<1x256xf32, #tpu.memory_space<vmem>>, vector<1x256xf32>
    %c0_5 = arith.constant 0 : index
    %c0_6 = arith.constant 0 : index
    %3 = vector.load %arg4[%c0_5, %c0_6] : memref<1x256xf32, #tpu.memory_space<vmem>>, vector<1x256xf32>
    tpu.vector_store %arg4[%c0_5, %c0_6], %2 {strides = array<i32>} : memref<1x256xf32, #tpu.memory_space<vmem>>, vector<1x256xf32>,
    return
  }
  func.func @transform_0(%arg0: i32) -> (i32, i32) {
    %c0_i32 = arith.constant 0 : i32
    %c0_i32_0 = arith.constant 0 : i32
    return %c0_i32, %arg0 : i32, i32
  }
  func.func @transform_1(%arg0: i32) -> (i32, i32) {
    %c0_i32 = arith.constant 0 : i32
    %c0_i32_0 = arith.constant 0 : i32
    return %c0_i32, %arg0 : i32, i32
  }
  func.func @transform_2(%arg0: i32) -> (i32, i32) {
    %c0_i32 = arith.constant 0 : i32
    %c0_i32_0 = arith.constant 0 : i32
    return %c0_i32, %arg0 : i32, i32
  }
  func.func @transform_3(%arg0: i32) -> (i32, i32) {
    %c0_i32 = arith.constant 0 : i32
    %c0_i32_0 = arith.constant 0 : i32
    return %c0_i32, %arg0 : i32, i32
  }
}

</mosaic_0001>

<llo_original>
// kernel: tpu_custom_call.1
$region0: #{tpu_custom_call.1}
  #allocation0 [shape = 'u32[]', space=smem, size = 0x4, offset = 0x4, fixed_abs, tag = 'smem constant byte address 0x4 - core index']
  #allocation1 [shape = 'u32[144,128]{1,0:T(1,128)}', space=vmem, size = 0x12000, scoped, tag = 'internal scratch']
  %s0 = inlined_call_operand.hbm [shape: f32[8,256], index: 0, kind: input, shape index: {}]
  %s1 = inlined_call_operand.vmem [shape: f32[1,256], index: 1, kind: input, shape index: {}]
  %s2 = inlined_call_operand.hbm [shape: f32[8,256], index: 2, kind: output, shape index: {0}]
  %s3 = inlined_call_operand.hbm [shape: f32[1,256], index: 3, kind: output, shape index: {1}]
  %4 = xla_tuple %s2, %s3
  %s5 = sld [smem:[#allocation0]]
  $region30: #{tpu_custom_call.1} parent=0
    _
  %s7 = ssub.s32 1, %s5
  %s8 = scalar_select 0, %s7, %s5
  $region1: #{tpu_custom_call.1} parent=0
    #allocation2 [shape = 'u8[8192]{0}', space=vmem, size = 0x2000, scoped, tag = 'input window, operand 0, single buffered']
    #allocation3 [shape = 's32[1]{0}', space=sflag, size = 0x4, scoped, tag = 'scoped memory for tpu_custom_call.1']
    #allocation4 [shape = 's32[1]{0}', space=sflag, size = 0x4, scoped, tag = 'scoped memory for tpu_custom_call.1']
    #allocation5 [shape = 'u8[8192]{0}', space=vmem, size = 0x2000, scoped, tag = 'output window, operand 0, single buffered']
    #allocation6 [shape = 'u8[1024]{0}', space=vmem, size = 0x400, scoped, tag = 'output window, operand 1, single buffered']
    #allocation7 [shape = 's32[1]{0}', space=sflag, size = 0x4, scoped, tag = 'scoped memory for tpu_custom_call.1']
    %9 = vsyncpa [#allocation3], 0
    %10 = vsyncpa [#allocation4], 0
    %11 = vsyncpa [#allocation7], 0
    // Predicated region
    $region2: #{tpu_custom_call.1} parent=1 // pred_check
      _
    $region3: #{tpu_custom_call.1} parent=1 // pred_check_branch
      %13 = sbr.rel (0) target = $region5
    $region4: #{tpu_custom_call.1} parent=1 // pred_region
      %s15 = ssub.s32 256, 256
      %16 = vsyncadd [#allocation3], %s15
      %s18 = sshll.u32 [#allocation2], 4
      %s19 = int_to_ptr.vmem [resolvable:$true] %s18
      %21 = dma.hbm_to_vmem [thread:$0]  %s0, 256, %s19, [#allocation3]
    $region5: #{tpu_custom_call.1} parent=1 // pred_fallthru
      _
    // Predicated region
    $region6: #{tpu_custom_call.1} parent=1 // pred_check
      _
    $region7: #{tpu_custom_call.1} parent=1 // pred_check_branch
      %23 = sbr.rel (0) target = $region9
    $region8: #{tpu_custom_call.1} parent=1 // pred_region
      _
    $region9: #{tpu_custom_call.1} parent=1 // pred_fallthru
      _
    // Predicated region
    $region10: #{tpu_custom_call.1} parent=1 // pred_check
      _
    $region11: #{tpu_custom_call.1} parent=1 // pred_check_branch
      %25 = sbr.rel (0) target = $region13
    $region12: #{tpu_custom_call.1} parent=1 // pred_region
      %26 = dma.done [#allocation3], 256
    $region13: #{tpu_custom_call.1} parent=1 // pred_fallthru
      _
    %v27 = vld [vmem:[#allocation2] sm:$0xff]
    %v28 = vld [vmem:[#allocation2 + $0x8] sm:$0xff]
    %29 = vst [vmem:[#allocation5] sm:$0xff] %v27
    %30 = vst [vmem:[#allocation5 + $0x8] sm:$0xff] %v28
    %v31 = vld [vmem:[%s1] sm:$0x3]
    %v32 = vlaneseq
    %vm33 = vcmp.ge.s32.totalorder %v32, 0
    %vm34 = vcmp.lt.s32.totalorder %v32, 256
    %vm35 = vmand %vm33, %vm34
    %36 = vst.msk [vmem:[#allocation6] sm:$0x3] %vm35, %v31
    // Predicated region
    $region14: #{tpu_custom_call.1} parent=1 // pred_check
      _
    $region15: #{tpu_custom_call.1} parent=1 // pred_check_branch
      %38 = sbr.rel (0) target = $region17
    $region16: #{tpu_custom_call.1} parent=1 // pred_region
      %s40 = ssub.s32 256, 256
      %41 = vsyncadd [#allocation4], %s40
      %s43 = sshll.u32 [#allocation5], 4
      %s44 = int_to_ptr.vmem [resolvable:$true] %s43
      %46 = dma.vmem_to_hbm [thread:$0]  %s44, 256, %s2, [#allocation4]
    $region17: #{tpu_custom_call.1} parent=1 // pred_fallthru
      _
    // Predicated region
    $region18: #{tpu_custom_call.1} parent=1 // pred_check
      _
    $region19: #{tpu_custom_call.1} parent=1 // pred_check_branch
      %48 = sbr.rel (0) target = $region21
    $region20: #{tpu_custom_call.1} parent=1 // pred_region
      %s50 = ssub.s32 32, 32
      %51 = vsyncadd [#allocation7], %s50
      %s53 = sshll.u32 [#allocation6], 4
      %s54 = int_to_ptr.vmem [resolvable:$true] %s53
      %56 = dma.vmem_to_hbm [thread:$0]  %s54, 32, %s3, [#allocation7]
    $region21: #{tpu_custom_call.1} parent=1 // pred_fallthru
      _
    // Predicated region
    $region22: #{tpu_custom_call.1} parent=1 // pred_check
      _
    $region23: #{tpu_custom_call.1} parent=1 // pred_check_branch
      %58 = sbr.rel (0) target = $region25
    $region24: #{tpu_custom_call.1} parent=1 // pred_region
      %59 = dma.done [#allocation4], 256
    $region25: #{tpu_custom_call.1} parent=1 // pred_fallthru
      _
    // Predicated region
    $region26: #{tpu_custom_call.1} parent=1 // pred_check
      _
    $region27: #{tpu_custom_call.1} parent=1 // pred_check_branch
      %61 = sbr.rel (0) target = $region29
    $region28: #{tpu_custom_call.1} parent=1 // pred_region
      %62 = dma.done [#allocation7], 32
    $region29: #{tpu_custom_call.1} parent=1 // pred_fallthru
      _
    %63 = vsyncpa [#allocation3], 1
    %64 = vsyncpa [#allocation4], 1
    %65 = vsyncpa [#allocation7], 1

</llo_original>
